<compile_context>
chip_gen: v7x
topology: tpu7x:2x2x1
jax: 0.10.0
libtpu: 0.0.40
codegen_flags: <defaults>
</compile_context>

<pallas_src>
import math

import jax
import jax.numpy as jnp
from jax.experimental import pallas as pl
from jax.experimental.pallas import tpu as pltpu


def _round_up(x, m):
    return ((x + m - 1) // m) * m


def _vmem_limit_bytes():
    """Generation-aware scoped-VMEM limit with ~20% headroom."""
    try:
        cap = pltpu.get_tpu_info().vmem_capacity_bytes
        return min(int(cap * 0.8), 112 * 1024 * 1024)
    except Exception:
        # Safe even on v7x (64 MiB physical VMEM per TensorCore).
        return 48 * 1024 * 1024


def _choose_tiles(M, N, K, tm, tn, tk):
    """Clamp tiles to the problem; keep (8, 128) alignment."""
    tm = min(tm, _round_up(M, 8))
    tn = min(tn, _round_up(N, 128))
    tk = min(tk, _round_up(K, 128))
    Mp, Np, Kp = _round_up(M, tm), _round_up(N, tn), _round_up(K, tk)
    # v7x has 2 TensorCores sharded over the "parallel" axes: avoid a 1x1
    # parallel grid for skinny-M shapes when N allows >1 column tile.
    if Mp // tm == 1 and Np // tn == 1 and N > 128:
        while tn > 128 and _round_up(N, tn) // tn < 2:
            tn = max(128, ((tn // 2) // 128) * 128)
        Np = _round_up(N, tn)
    return tm, tn, tk, Mp, Np, Kp


# ---------------------------------------------------------------------------
# Kernels
# ---------------------------------------------------------------------------
def _matmul_kernel_accout(x_ref, w_ref, o_ref):
    """f32 output: accumulate directly into the resident output block."""
    @pl.when(pl.program_id(2) == 0)
    def _():
        o_ref[...] = jnp.zeros_like(o_ref)

    o_ref[...] += jnp.dot(
        x_ref[...], w_ref[...], preferred_element_type=jnp.float32
    )


def _matmul_kernel_scratch(x_ref, w_ref, o_ref, acc_ref):
    """Non-f32 output: accumulate in a f32 VMEM scratch, cast on last k."""
    @pl.when(pl.program_id(2) == 0)
    def _():
        acc_ref[...] = jnp.zeros_like(acc_ref)

    acc_ref[...] += jnp.dot(
        x_ref[...], w_ref[...], preferred_element_type=jnp.float32
    )

    @pl.when(pl.program_id(2) == pl.num_programs(2) - 1)
    def _():
        o_ref[...] = acc_ref[...].astype(o_ref.dtype)


def _matmul_padded(xp, wtp, out_dtype, tm, tn, tk, true_m, true_n, true_k):
    """out[Mp, Np] = xp[Mp, Kp] @ wtp[Kp, Np] with K-reduction last."""
    Mp, Kp = xp.shape
    Kp2, Np = wtp.shape
    assert Kp == Kp2
    grid = (Mp // tm, Np // tn, Kp // tk)

    f32_out = jnp.dtype(out_dtype) == jnp.dtype(jnp.float32)
    kernel = _matmul_kernel_accout if f32_out else _matmul_kernel_scratch
    scratch = [] if f32_out else [pltpu.VMEM((tm, tn), jnp.float32)]

    in_itemsize = jnp.dtype(xp.dtype).itemsize
    out_itemsize = jnp.dtype(out_dtype).itemsize
    cost = pl.CostEstimate(
        flops=2 * true_m * true_n * true_k,
        transcendentals=0,
        # x re-read once per column tile, weight once per row tile.
        bytes_accessed=(true_m * true_k * grid[1] + true_n * true_k * grid[0])
        * in_itemsize
        + true_m * true_n * out_itemsize,
    )

    return pl.pallas_call(
        kernel,
        out_shape=jax.ShapeDtypeStruct((Mp, Np), out_dtype),
        grid_spec=pltpu.PrefetchScalarGridSpec(
            num_scalar_prefetch=0,
            grid=grid,
            in_specs=[
                pl.BlockSpec((tm, tk), lambda i, j, k: (i, k)),  # x tile
                pl.BlockSpec((tk, tn), lambda i, j, k: (k, j)),  # w^T tile
            ],
            out_specs=pl.BlockSpec((tm, tn), lambda i, j, k: (i, j)),
            scratch_shapes=scratch,
        ),
        compiler_params=pltpu.CompilerParams(
            dimension_semantics=("parallel", "parallel", "arbitrary"),
            vmem_limit_bytes=_vmem_limit_bytes(),
        ),
        cost_estimate=cost,
    )(xp, wtp)


# ---------------------------------------------------------------------------
# Module-like wrapper (weight prepared once, hoisted out of forward)
# ---------------------------------------------------------------------------
class CustomLinearPallas:
    """Mirrors CustomLinear.forward: out = x @ weight.T (bias held, unused)."""

    def __init__(
        self,
        weight,
        bias=None,
        *,
        compute_dtype=jnp.bfloat16,
        tm=512,
        tn=512,
        tk=1024,
        batch_hint=None,
    ):
        N, K = weight.shape
        self.N, self.K = N, K
        self.compute_dtype = compute_dtype
        m_hint = batch_hint if batch_hint is not None else 1 << 30
        self.tm, self.tn, self.tk, _, self.Np, self.Kp = _choose_tiles(
            m_hint, N, K, tm, tn, tk
        )
        # One-time weight prep: [N, K] -> [K, N], pad to (Kp, Np), cast.
        wt = weight.T
        if (self.Kp, self.Np) != (K, N):
            wt = jnp.pad(wt, ((0, self.Kp - K), (0, self.Np - N)))
        self.w_prepared = wt.astype(compute_dtype)
        self.bias = bias  # mirrors the module's parameter; forward never uses it

    def __call__(self, x):
        M, K = x.shape
        assert K == self.K, "in_features mismatch"
        out_dtype = x.dtype

        tm = min(self.tm, _round_up(M, 8))
        Mp = _round_up(M, tm)
        xp = x
        if (Mp, self.Kp) != (M, K):
            xp = jnp.pad(xp, ((0, Mp - M), (0, self.Kp - K)))
        xp = xp.astype(self.compute_dtype)

        out = _matmul_padded(
            xp, self.w_prepared, out_dtype, tm, self.tn, self.tk, M, self.N, K
        )
        if (Mp, self.Np) != (M, self.N):
            out = out[:M, : self.N]
        return out


def custom_linear(x, weight, *, compute_dtype=jnp.bfloat16, tm=512, tn=512, tk=1024):
    """Functional one-shot API: out[M, N] = x[M, K] @ weight[N, K].T."""
    layer = CustomLinearPallas(
        weight,
        compute_dtype=compute_dtype,
        tm=tm,
        tn=tn,
        tk=tk,
        batch_hint=x.shape[0],
    )
    return layer(x)


def init_params(key, in_features, out_features, bias=True):
    """Deterministic init mirroring CustomLinear.reset_parameters."""
    kw, kb = jax.random.split(key)
    # kaiming_uniform_(a=sqrt(5)) -> bound = 1/sqrt(fan_in)
    w_bound = 1.0 / math.sqrt(in_features)
    weight = jax.random.uniform(
        kw, (out_features, in_features), jnp.float32, -w_bound, w_bound
    )
    if bias:
        b_bound = 1.0 / math.sqrt(in_features)
        b = jax.random.uniform(kb, (out_features,), jnp.float32, -b_bound, b_bound)
    else:
        b = None
    # NOTE: bias mirrors the module's parameter but forward() never uses it.
    return weight, b


if __name__ == "__main__":
    key = jax.random.PRNGKey(0)
    k_x, k_p = jax.random.split(key)

    batch, in_features, out_features = 8, 32, 16
    x = jax.random.normal(k_x, (batch, in_features), jnp.float32)
    weight, _bias = init_params(k_p, in_features, out_features, bias=True)

    ref = x @ weight.T

    # Exact-f32 path (matches torch mm semantics).
    out_f32 = jax.block_until_ready(custom_linear(x, weight, compute_dtype=jnp.float32))
    assert out_f32.shape == (batch, out_features)
    assert jnp.allclose(out_f32, ref, atol=1e-5, rtol=1e-5)

    # Default fast path: bf16 MXU inputs with f32 accumulation.
    out_bf16 = jax.block_until_ready(custom_linear(x, weight))
    assert out_bf16.shape == (batch, out_features)
    assert jnp.allclose(out_bf16, ref, atol=5e-2, rtol=5e-2)

    # TODO(synk): custom backward (grad_input = grad_output @ weight) not
    # implemented; only the forward pass is required here.
    print("KERNEL_OK")
</pallas_src>

<mosaic_0001>
module attributes {stable_mosaic.version = 11 : i64} {
  func.func @_matmul_kernel_accout(%arg0: i32, %arg1: i32, %arg2: i32, %arg3: memref<8x128xf32, #tpu.memory_space<vmem>>, %arg4: memref<128x128xf32, #tpu.memory_space<vmem>>, %arg5: memref<8x128xf32, #tpu.memory_space<vmem>>) attributes {dimension_semantics = [#tpu.dimension_semantics<parallel>, #tpu.dimension_semantics<parallel>, #tpu.dimension_semantics<arbitrary>], iteration_bounds = array<i64: 1, 1, 1>, scalar_prefetch = 0 : i64, scratch_operands = 0 : i64, tpu.core_type = #tpu.core_type<tc>, window_params = [{transform_indices = @transform_0, window_bounds = array<i64: 8, 128>}, {transform_indices = @transform_1, window_bounds = array<i64: 128, 128>}, {transform_indices = @transform_2, window_bounds = array<i64: 8, 128>}]} {
    %c0_i32 = arith.constant 0 : i32
    %0 = arith.cmpi eq, %arg2, %c0_i32 : i32
    %1 = arith.extui %0 : i1 to i32
    %c0_i32_0 = arith.constant 0 : i32
    %2 = arith.cmpi ne, %1, %c0_i32_0 : i32
    scf.if %2 {
      %cst_8 = arith.constant 0.000000e+00 : f32
      %9 = vector.broadcast %cst_8 : f32 to vector<8x128xf32>
      %c0_9 = arith.constant 0 : index
      %c0_10 = arith.constant 0 : index
      %10 = vector.load %arg5[%c0_9, %c0_10] : memref<8x128xf32, #tpu.memory_space<vmem>>, vector<8x128xf32>
      tpu.vector_store %arg5[%c0_9, %c0_10], %9 {strides = array<i32>} : memref<8x128xf32, #tpu.memory_space<vmem>>, vector<8x128xf32>,
    } else {
    }
    %c0 = arith.constant 0 : index
    %c0_1 = arith.constant 0 : index
    %3 = vector.load %arg5[%c0, %c0_1] : memref<8x128xf32, #tpu.memory_space<vmem>>, vector<8x128xf32>
    %c0_2 = arith.constant 0 : index
    %c0_3 = arith.constant 0 : index
    %4 = vector.load %arg3[%c0_2, %c0_3] : memref<8x128xf32, #tpu.memory_space<vmem>>, vector<8x128xf32>
    %c0_4 = arith.constant 0 : index
    %c0_5 = arith.constant 0 : index
    %5 = vector.load %arg4[%c0_4, %c0_5] : memref<128x128xf32, #tpu.memory_space<vmem>>, vector<128x128xf32>
    %cst = arith.constant dense<0.000000e+00> : vector<8x128xf32>
    %6 = tpu.matmul %4, %5, %cst {dimension_numbers = #tpu.dot_dimension_numbers<[1], [0], [0], [1], [0, 0, 1, 1], [], []>} : vector<8x128xf32>, vector<128x128xf32>, vector<8x128xf32> -> vector<8x128xf32>
    %7 = arith.addf %3, %6 : vector<8x128xf32>
    %c0_6 = arith.constant 0 : index
    %c0_7 = arith.constant 0 : index
    %8 = vector.load %arg5[%c0_6, %c0_7] : memref<8x128xf32, #tpu.memory_space<vmem>>, vector<8x128xf32>
    tpu.vector_store %arg5[%c0_6, %c0_7], %7 {strides = array<i32>} : memref<8x128xf32, #tpu.memory_space<vmem>>, vector<8x128xf32>,
    return
  }
  func.func @transform_0(%arg0: i32, %arg1: i32, %arg2: i32) -> (i32, i32) {
    %c0_i32 = arith.constant 0 : i32
    return %arg0, %arg2 : i32, i32
  }
  func.func @transform_1(%arg0: i32, %arg1: i32, %arg2: i32) -> (i32, i32) {
    %c0_i32 = arith.constant 0 : i32
    return %arg2, %arg1 : i32, i32
  }
  func.func @transform_2(%arg0: i32, %arg1: i32, %arg2: i32) -> (i32, i32) {
    %c0_i32 = arith.constant 0 : i32
    return %arg0, %arg1 : i32, i32
  }
}

</mosaic_0001>

<llo_original>
// kernel: tpu_custom_call.1
$region0: #{tpu_custom_call.1}
  #allocation0 [shape = 'u32[]', space=smem, size = 0x4, offset = 0x4, fixed_abs, tag = 'smem constant byte address 0x4 - core index']
  #allocation1 [shape = 'u32[144,128]{1,0:T(1,128)}', space=vmem, size = 0x12000, scoped, tag = 'internal scratch']
  %s0 = inlined_call_operand.hbm [shape: f32[8,128], index: 0, kind: input, shape index: {}]
  %s1 = inlined_call_operand.hbm [shape: f32[128,128], index: 1, kind: input, shape index: {}]
  %s2 = inlined_call_operand.hbm [shape: f32[8,128], index: 2, kind: output, shape index: {}]
  %s3 = sld [smem:[#allocation0]]
  $region30: #{tpu_custom_call.1} parent=0
    _
  %s5 = ssub.s32 1, %s3
  %s6 = scalar_select 0, %s5, %s3
  $region1: #{tpu_custom_call.1} parent=0
    #allocation2 [shape = 'u8[4096]{0}', space=vmem, size = 0x1000, scoped, tag = 'input window, operand 0, single buffered']
    #allocation3 [shape = 's32[1]{0}', space=sflag, size = 0x4, scoped, tag = 'scoped memory for tpu_custom_call.1']
    #allocation4 [shape = 's32[1]{0}', space=sflag, size = 0x4, scoped, tag = 'scoped memory for tpu_custom_call.1']
    #allocation5 [shape = 'u8[65536]{0}', space=vmem, size = 0x10000, scoped, tag = 'input window, operand 1, single buffered']
    #allocation6 [shape = 's32[1]{0}', space=sflag, size = 0x4, scoped, tag = 'scoped memory for tpu_custom_call.1']
    #allocation7 [shape = 'u8[4096]{0}', space=vmem, size = 0x1000, scoped, tag = 'output window, operand 0, single buffered']
    %7 = vsyncpa [#allocation3], 0
    %8 = vsyncpa [#allocation6], 0
    %9 = vsyncpa [#allocation4], 0
    // Predicated region
    $region2: #{tpu_custom_call.1} parent=1 // pred_check
      _
    $region3: #{tpu_custom_call.1} parent=1 // pred_check_branch
      %11 = sbr.rel (0) target = $region5
    $region4: #{tpu_custom_call.1} parent=1 // pred_region
      %s13 = ssub.s32 128, 128
      %14 = vsyncadd [#allocation3], %s13
      %s16 = sshll.u32 [#allocation2], 4
      %s17 = int_to_ptr.vmem [resolvable:$true] %s16
      %19 = dma.hbm_to_vmem [thread:$0]  %s0, 128, %s17, [#allocation3]
    $region5: #{tpu_custom_call.1} parent=1 // pred_fallthru
      _
    // Predicated region
    $region6: #{tpu_custom_call.1} parent=1 // pred_check
      _
    $region7: #{tpu_custom_call.1} parent=1 // pred_check_branch
      %21 = sbr.rel (0) target = $region9
    $region8: #{tpu_custom_call.1} parent=1 // pred_region
      %s23 = ssub.s32 2048, 2048
      %24 = vsyncadd [#allocation6], %s23
      %s25 = sshll.u32 [#allocation5], 4
      %s26 = int_to_ptr.vmem [resolvable:$true] %s25
      %31 = dma.hbm_to_vmem [thread:$0]  %s1, 2048, %s26, [#allocation6], 128, 128, 8
    $region9: #{tpu_custom_call.1} parent=1 // pred_fallthru
      _
    // Predicated region
    $region10: #{tpu_custom_call.1} parent=1 // pred_check
      _
    $region11: #{tpu_custom_call.1} parent=1 // pred_check_branch
      %33 = sbr.rel (0) target = $region13
    $region12: #{tpu_custom_call.1} parent=1 // pred_region
      %34 = dma.done [#allocation3], 128
    $region13: #{tpu_custom_call.1} parent=1 // pred_fallthru
      _
    // Predicated region
    $region14: #{tpu_custom_call.1} parent=1 // pred_check
      _
    $region15: #{tpu_custom_call.1} parent=1 // pred_check_branch
      %36 = sbr.rel (0) target = $region17
    $region16: #{tpu_custom_call.1} parent=1 // pred_region
      %37 = dma.done [#allocation6], 2048
    $region17: #{tpu_custom_call.1} parent=1 // pred_fallthru
      _
    %p38 = scmp.eq.s32.totalorder 0, 0
    // Predicated region
    $region18: #{tpu_custom_call.1} parent=1 // pred_check
      %p39 = pneg %p38
    $region19: #{tpu_custom_call.1} parent=1 // pred_check_branch
      %41 = sbr.rel (%p39) target = $region21
    $region20: #{tpu_custom_call.1} parent=1 // pred_region
      %42 = vst [vmem:[#allocation7] sm:$0xff] 0.0
    $region21: #{tpu_custom_call.1} parent=1 // pred_fallthru
      _
    %v43 = vld [vmem:[#allocation7] sm:$0xff]
    %v44 = vld [vmem:[#allocation2] sm:$0xff]
    %v45 = vld [vmem:[#allocation5] sm:$0xff]
    %v46 = vld [vmem:[#allocation5 + $0x8] sm:$0xff]
    %v47 = vld [vmem:[#allocation5 + $0x10] sm:$0xff]
    %v48 = vld [vmem:[#allocation5 + $0x18] sm:$0xff]
    %v49 = vld [vmem:[#allocation5 + $0x20] sm:$0xff]
    %v50 = vld [vmem:[#allocation5 + $0x28] sm:$0xff]
    %v51 = vld [vmem:[#allocation5 + $0x30] sm:$0xff]
    %v52 = vld [vmem:[#allocation5 + $0x38] sm:$0xff]
    %v53 = vld [vmem:[#allocation5 + $0x40] sm:$0xff]
    %v54 = vld [vmem:[#allocation5 + $0x48] sm:$0xff]
    %v55 = vld [vmem:[#allocation5 + $0x50] sm:$0xff]
    %v56 = vld [vmem:[#allocation5 + $0x58] sm:$0xff]
    %v57 = vld [vmem:[#allocation5 + $0x60] sm:$0xff]
    %v58 = vld [vmem:[#allocation5 + $0x68] sm:$0xff]
    %v59 = vld [vmem:[#allocation5 + $0x70] sm:$0xff]
    %v60 = vld [vmem:[#allocation5 + $0x78] sm:$0xff]
    %61 = vmatprep.subr.mxu0 0.0
    %62 = vmatpush1.msra.mxu0 %v45
    %63 = vmatprep.subr.mxu0 0.0
    %64 = vmatpush1.msra.mxu0 %v46
    %65 = vmatprep.subr.mxu0 0.0
    %66 = vmatpush1.msra.mxu0 %v47
    %67 = vmatprep.subr.mxu0 0.0
    %68 = vmatpush1.msra.mxu0 %v48
    %69 = vmatprep.subr.mxu0 0.0
    %70 = vmatpush1.msra.mxu0 %v49
    %71 = vmatprep.subr.mxu0 0.0
    %72 = vmatpush1.msra.mxu0 %v50
    %73 = vmatprep.subr.mxu0 0.0
    %74 = vmatpush1.msra.mxu0 %v51
    %75 = vmatprep.subr.mxu0 0.0
    %76 = vmatpush1.msra.mxu0 %v52
    %77 = vmatprep.subr.mxu0 0.0
    %78 = vmatpush1.msra.mxu0 %v53
    %79 = vmatprep.subr.mxu0 0.0
    %80 = vmatpush1.msra.mxu0 %v54
    %81 = vmatprep.subr.mxu0 0.0
    %82 = vmatpush1.msra.mxu0 %v55
    %83 = vmatprep.subr.mxu0 0.0
    %84 = vmatpush1.msra.mxu0 %v56
    %85 = vmatprep.subr.mxu0 0.0
    %86 = vmatpush1.msra.mxu0 %v57
    %87 = vmatprep.subr.mxu0 0.0
    %88 = vmatpush1.msra.mxu0 %v58
    %89 = vmatprep.subr.mxu0 0.0
    %90 = vmatpush1.msra.mxu0 %v59
    %91 = vmatprep.subr.mxu0 0.0
    %92 = vmatpush1.msra.mxu0 %v60
    %93 = vmatprep.subr.mxu0 0.0
    %94 = vmatpush1.msra.mxu0 0.0
    %95 = vmatprep.subr.mxu0 0.0
    %96 = vmatpush1.msra.mxu0 0.0
    %97 = vmatprep.subr.mxu0 0.0
    %98 = vmatpush1.msra.mxu0 0.0
    %99 = vmatprep.subr.mxu0 0.0
    %100 = vmatpush1.msra.mxu0 0.0
    %101 = vmatprep.subr.mxu0 0.0
    %102 = vmatpush1.msra.mxu0 0.0
    %103 = vmatprep.subr.mxu0 0.0
    %104 = vmatpush1.msra.mxu0 0.0
    %105 = vmatprep.subr.mxu0 0.0
    %106 = vmatpush1.msra.mxu0 0.0
    %107 = vmatprep.subr.mxu0 0.0
    %108 = vmatpush1.msra.mxu0 0.0
    %109 = vmatprep.subr.mxu0 0.0
    %110 = vmatpush1.msra.mxu0 0.0
    %111 = vmatprep.subr.mxu0 0.0
    %112 = vmatpush1.msra.mxu0 0.0
    %113 = vmatprep.subr.mxu0 0.0
    %114 = vmatpush1.msra.mxu0 0.0
    %115 = vmatprep.subr.mxu0 0.0
    %116 = vmatpush1.msra.mxu0 0.0
    %117 = vmatprep.subr.mxu0 0.0
    %118 = vmatpush1.msra.mxu0 0.0
    %119 = vmatprep.subr.mxu0 0.0
    %120 = vmatpush1.msra.mxu0 0.0
    %121 = vmatprep.subr.mxu0 0.0
    %122 = vmatpush1.msra.mxu0 0.0
    %123 = vmatprep.subr.mxu0 0.0
    %124 = vmatpush1.msra.mxu0 0.0
    %125 = vmatprep.mubr.f32.mxu0 0.0
    %126 = vmatmul.mubr.f32.gmra.mrb[0].mxu0 %v44
    %v127 = vpop.f32.mrb[0].mxu0
    %v128 = vadd.f32 0.0, %v127
    %v129 = vpop.f32.mrb[0].mxu0
    %130 = vdwg.mxu0
    %v131 = vadd.f32 %v43, %v128
    %132 = vst [vmem:[#allocation7] sm:$0xff] %v131
    // Predicated region
    $region22: #{tpu_custom_call.1} parent=1 // pred_check
      _
    $region23: #{tpu_custom_call.1} parent=1 // pred_check_branch
      %134 = sbr.rel (0) target = $region25
    $region24: #{tpu_custom_call.1} parent=1 // pred_region
      %s136 = ssub.s32 128, 128
      %137 = vsyncadd [#allocation4], %s136
      %s139 = sshll.u32 [#allocation7], 4
      %s140 = int_to_ptr.vmem [resolvable:$true] %s139
      %142 = dma.vmem_to_hbm [thread:$0]  %s140, 128, %s2, [#allocation4]
    $region25: #{tpu_custom_call.1} parent=1 // pred_fallthru
      _
    // Predicated region
    $region26: #{tpu_custom_call.1} parent=1 // pred_check
      _
    $region27: #{tpu_custom_call.1} parent=1 // pred_check_branch
      %144 = sbr.rel (0) target = $region29
    $region28: #{tpu_custom_call.1} parent=1 // pred_region
      %145 = dma.done [#allocation4], 128
    $region29: #{tpu_custom_call.1} parent=1 // pred_fallthru
      _
    %146 = vsyncpa [#allocation3], 1
    %147 = vsyncpa [#allocation6], 1
    %148 = vsyncpa [#allocation4], 1

</llo_original>
